<compile_context>
chip_gen: v5e
topology: v5e:2x2
jax: 0.10.0
libtpu: 0.0.40
codegen_flags: <defaults>
</compile_context>

<pallas_src>
import functools

import numpy as np
import jax
import jax.numpy as jnp
from jax.experimental import pallas as pl
from jax.experimental.pallas import tpu as pltpu


def _round_up(x, m):
    return (x + m - 1) // m * m


# ----------------------------------------------------------------------------
# Pallas kernel: one batch tile of the output.
# ----------------------------------------------------------------------------
def _selector_kernel(x_ref, idx_ref, o_ref, *, prefix_cols, out_chunk):
    # x_ref:   [tm, D_in]         input rows (VMEM)
    # idx_ref: [1, n_sel] int32   source row of x for each matmul'ed output col
    # o_ref:   [tm, D_out]        output rows (VMEM).  Columns [0, prefix_cols)
    #                             are a verbatim (lane-aligned) copy of x;
    #                             columns [prefix_cols, D_out) come from the
    #                             in-kernel one-hot MXU gather.
    d_in = x_ref.shape[1]
    n_sel = idx_ref.shape[1]
    x = x_ref[...]

    if prefix_cols > 0:
        # 128-lane aligned identity prefix: plain vector copy, no MXU.
        o_ref[:, :prefix_cols] = x[:, :prefix_cols]

    # Stream the gathered columns in lane-aligned output chunks so no full
    # [tm, n_sel] f32 intermediate is ever materialized.
    for c0 in range(0, n_sel, out_chunk):
        cw = min(out_chunk, n_sel - c0)
        idx_c = idx_ref[:, c0:c0 + cw]                                   # [1, cw]
        row_ids = jax.lax.broadcasted_iota(jnp.int32, (d_in, cw), 0)
        sel = (row_ids == idx_c).astype(x.dtype)                         # [d_in, cw]
        # One-hot gather on the MXU: exactly one 1.0 per output column, so the
        # result reproduces x's columns bit-exactly (bf16 native; f32 path
        # validated exact on TPU since the single product/sum is exact).
        g = jnp.dot(x, sel, preferred_element_type=jnp.float32)
        o_ref[:, prefix_cols + c0:prefix_cols + c0 + cw] = g.astype(o_ref.dtype)


# ----------------------------------------------------------------------------
# Wrapper: out = concat([x, x[:, indices]], axis=1)
# ----------------------------------------------------------------------------
def dimension_selector_forward(x, indices, *, block_b=None, out_chunk=256,
                               vmem_cap_bytes=None):
    """Pallas TPU forward for DimensionSelector.

    x: [B, D_in] jax array.  indices: host-side int array (fixed at module
    construction, as in the torch module).  Returns [B, D_in + len(indices)].
    Callers with extra leading dims should fold them into B before calling.
    """
    assert x.ndim == 2, "fold leading dims into the batch axis before calling"
    B, D_in = x.shape
    idx_np = np.asarray(indices, dtype=np.int32).reshape(-1)
    D_extra = int(idx_np.shape[0])
    if D_extra == 0:                      # nothing to replicate
        return x
    assert np.all((idx_np >= 0) & (idx_np < D_in)), "selector indices out of range"
    D_out = D_in + D_extra

    # Identity prefix = largest 128-lane aligned prefix of x; the unaligned
    # tail of x (< 128 cols) plus the replicated columns go through the MXU.
    prefix = (D_in // 128) * 128
    col_src_np = np.concatenate(
        [np.arange(prefix, D_in, dtype=np.int32), idx_np])
    n_sel = int(col_src_np.shape[0])
    col_src = jnp.asarray(col_src_np.reshape(1, n_sel))

    # Output-chunk width for the streamed matmul (multiple of 128 lanes).
    out_chunk = max(128, (int(out_chunk) // 128) * 128)

    itemsize = jnp.dtype(x.dtype).itemsize

    # Chip-aware VMEM cap: 64 MiB on 128-MiB parts (v5e/v6e), 32 MiB otherwise
    # (safe on v7x's 64 MiB physical VMEM).
    if vmem_cap_bytes is None:
        cap = 32 << 20
        try:
            phys = pltpu.get_tpu_info().vmem_capacity_bytes
            if phys >= (128 << 20):
                cap = 64 << 20
        except Exception:
            pass
    else:
        cap = int(vmem_cap_bytes)

    # Autosize the batch tile from the VMEM budget (double-buffered x/out
    # blocks + f32 matmul chunk + one-hot temporaries + compiler slack).
    eff_chunk = min(out_chunk, n_sel)
    per_row = (2 * (D_in + D_out) * itemsize      # double-buffered in/out blocks
               + eff_chunk * 4)                   # transient f32 matmul chunk
    fixed = (2 * n_sel * 4                        # col_src (double-buffered)
             + 2 * D_in * eff_chunk * max(itemsize, 4)   # iota + one-hot chunk
             + (2 << 20))                         # compiler scratch slack
    tm_budget = max((cap - fixed) // per_row, 8)
    tm = int(max(256, min(1024, tm_budget)))
    if block_b is not None:
        tm = min(tm, int(block_b))
    # Keep >= 2 grid steps so "parallel" semantics can use both v7x TensorCores.
    tm = min(tm, _round_up(pl.cdiv(B, 2), 8))
    tm = max(8, (tm // 8) * 8)

    grid = (pl.cdiv(B, tm),)   # ragged last block handled by Pallas (no jnp.pad)

    # TODO(synk): for very large D_in (thousands), chunk the contraction dim /
    # group selected columns by their source 128-lane group so each K chunk
    # only feeds the output columns it sources; unnecessary at these widths.

    out = pl.pallas_call(
        functools.partial(_selector_kernel, prefix_cols=prefix,
                          out_chunk=out_chunk),
        out_shape=jax.ShapeDtypeStruct((B, D_out), x.dtype),
        grid_spec=pltpu.PrefetchScalarGridSpec(
            num_scalar_prefetch=0,
            grid=grid,
            in_specs=[
                pl.BlockSpec((tm, D_in), lambda i: (i, 0)),
                pl.BlockSpec((1, n_sel), lambda i: (0, 0)),   # fetched once
            ],
            out_specs=pl.BlockSpec((tm, D_out), lambda i: (i, 0)),
        ),
        compiler_params=pltpu.CompilerParams(
            dimension_semantics=("parallel",),   # batch tiles -> both TCs on v7x
            vmem_limit_bytes=int(cap),
        ),
    )(x, col_src)

    return out


# ----------------------------------------------------------------------------
# Module setup (mirrors DimensionSelector.__init__), deterministic in-script.
# ----------------------------------------------------------------------------
def build_selector_indices(input_dim, output_dim, seed=0):
    assert output_dim > input_dim, "Selection does not select all inputs"
    remain = output_dim - input_dim
    scale = int(np.ceil(output_dim / input_dim) - 1)
    rng = np.random.default_rng(seed)
    indices = np.zeros((0,), dtype=np.int32)
    for _ in range(scale):
        c = min(input_dim, remain - len(indices))
        perm = rng.permutation(input_dim)[:c].astype(np.int32)
        indices = np.concatenate([indices, perm])
    assert indices.shape[0] == remain
    return indices


# ----------------------------------------------------------------------------
# Demo / correctness check
# ----------------------------------------------------------------------------
if __name__ == "__main__":
    base_key = jax.random.PRNGKey(0)

    # (B, input_dim, output_dim, dtype):
    #  1) aligned D_in fast path + ragged batch (B % tm != 0) + 2-step grid
    #  2) D_in < 128: no aligned prefix, whole concat via one one-hot matmul
    #  3) unaligned D_in > 128: aligned 128-prefix copy + multi-chunk matmul
    #  4) bf16 input on the native bf16 MXU path
    cases = [
        (500, 128, 320, jnp.float32),
        (64,  96,  224, jnp.float32),
        (48,  160, 600, jnp.float32),
        (256, 128, 288, jnp.bfloat16),
    ]

    for t, (B, d_in, d_out, dtype) in enumerate(cases):
        indices = build_selector_indices(d_in, d_out, seed=t)
        key = jax.random.fold_in(base_key, t)
        x = jax.random.normal(key, (B, d_in), dtype=dtype)

        out = jax.block_until_ready(dimension_selector_forward(x, indices))

        # Reference (plain JAX): torch.cat([x, x[:, indices]], dim=1)
        ref = jnp.concatenate([x, x[:, jnp.asarray(indices)]], axis=1)
        assert out.shape == (B, d_out)
        assert out.dtype == x.dtype
        np.testing.assert_array_equal(np.asarray(out.astype(jnp.float32)),
                                      np.asarray(ref.astype(jnp.float32)))

    print("KERNEL_OK")
</pallas_src>

<mosaic_0001>
module attributes {stable_mosaic.version = 11 : i64} {
  func.func @_selector_kernel(%arg0: i32, %arg1: memref<256x128xf32, #tpu.memory_space<vmem>>, %arg2: memref<1x192xi32, #tpu.memory_space<vmem>>, %arg3: memref<256x320xf32, #tpu.memory_space<vmem>>) attributes {dimension_semantics = [#tpu.dimension_semantics<parallel>], iteration_bounds = array<i64: 2>, scalar_prefetch = 0 : i64, scratch_operands = 0 : i64, tpu.core_type = #tpu.core_type<tc>, window_params = [{transform_indices = @transform_0, window_bounds = array<i64: 256, 128>}, {pipeline_mode = #tpu.pipeline_mode<synchronous>, transform_indices = @transform_1, window_bounds = array<i64: 1, 192>}, {transform_indices = @transform_2, window_bounds = array<i64: 256, 320>}]} {
    %c0 = arith.constant 0 : index
    %c0_0 = arith.constant 0 : index
    %0 = vector.load %arg1[%c0, %c0_0] : memref<256x128xf32, #tpu.memory_space<vmem>>, vector<256x128xf32>
    %c0_1 = arith.constant 0 : index
    %c0_2 = arith.constant 0 : index
    %1 = vector.load %arg3[%c0_1, %c0_2] : memref<256x320xf32, #tpu.memory_space<vmem>>, vector<256x128xf32>
    tpu.vector_store %arg3[%c0_1, %c0_2], %0 {strides = array<i32>} : memref<256x320xf32, #tpu.memory_space<vmem>>, vector<256x128xf32>,
    %c0_3 = arith.constant 0 : index
    %c0_4 = arith.constant 0 : index
    %2 = vector.load %arg2[%c0_3, %c0_4] : memref<1x192xi32, #tpu.memory_space<vmem>>, vector<1x192xi32>
    %3 = tpu.iota {dimensions = array<i32: 0>} : vector<128x192xi32>
    %4 = vector.broadcast %2 : vector<1x192xi32> to vector<128x192xi32>
    %5 = arith.cmpi eq, %3, %4 : vector<128x192xi32>
    %6 = arith.extui %5 : vector<128x192xi1> to vector<128x192xi32>
    %7 = arith.sitofp %6 : vector<128x192xi32> to vector<128x192xf32>
    %cst = arith.constant dense<0.000000e+00> : vector<256x192xf32>
    %8 = tpu.matmul %0, %7, %cst {dimension_numbers = #tpu.dot_dimension_numbers<[1], [0], [0], [1], [0, 0, 1, 1], [], []>} : vector<256x128xf32>, vector<128x192xf32>, vector<256x192xf32> -> vector<256x192xf32>
    %c0_5 = arith.constant 0 : index
    %c128 = arith.constant 128 : index
    %9 = vector.load %arg3[%c0_5, %c128] : memref<256x320xf32, #tpu.memory_space<vmem>>, vector<256x192xf32>
    tpu.vector_store %arg3[%c0_5, %c128], %8 {strides = array<i32>} : memref<256x320xf32, #tpu.memory_space<vmem>>, vector<256x192xf32>,
    return
  }
  func.func @transform_0(%arg0: i32) -> (i32, i32) {
    %c0_i32 = arith.constant 0 : i32
    %c0_i32_0 = arith.constant 0 : i32
    return %arg0, %c0_i32 : i32, i32
  }
  func.func @transform_1(%arg0: i32) -> (i32, i32) {
    %c0_i32 = arith.constant 0 : i32
    %c0_i32_0 = arith.constant 0 : i32
    %c0_i32_1 = arith.constant 0 : i32
    return %c0_i32, %c0_i32_0 : i32, i32
  }
  func.func @transform_2(%arg0: i32) -> (i32, i32) {
    %c0_i32 = arith.constant 0 : i32
    %c0_i32_0 = arith.constant 0 : i32
    return %arg0, %c0_i32 : i32, i32
  }
}

</mosaic_0001>

<llo_original>
// kernel: tpu_custom_call.1
$region0: #{tpu_custom_call.1}
  #allocation0 [shape = 'u32[]', space=smem, size = 0x4, offset = 0x4, fixed_abs, tag = 'smem constant byte address 0x4 - core index']
  #allocation1 [shape = 'u32[72,128]{1,0:T(1,128)}', space=vmem, size = 0x9000, scoped, tag = 'internal scratch']
  %s0 = inlined_call_operand.hbm [shape: f32[500,128], index: 0, kind: input, shape index: {}]
  %s1 = inlined_call_operand.hbm [shape: s32[1,192], index: 1, kind: input, shape index: {}]
  %s2 = inlined_call_operand.vmem [shape: f32[500,320], index: 2, kind: output, shape index: {}]
  %s3 = sld [smem:[#allocation0]]
  $region75: #{tpu_custom_call.1} parent=0
    _
  %s5 = ssub.s32 1, %s3
  %s6 = scalar_select 0, %s5, %s3
  $region1: #{tpu_custom_call.1} parent=0
    #allocation2 [shape = 'u8[262144]{0}', space=vmem, size = 0x40000, scoped, tag = 'input window, operand 0']
    #allocation3 [shape = 's32[2]{0}', space=sflag, size = 0x8, scoped, tag = 'scoped memory for tpu_custom_call.1']
    #allocation4 [shape = 'u8[1024]{0}', space=vmem, size = 0x400, scoped, tag = 'input window, operand 1, single buffered']
    #allocation5 [shape = 's32[1]{0}', space=sflag, size = 0x4, scoped, tag = 'scoped memory for tpu_custom_call.1']
    #allocation6 [shape = 'u8[786432]{0}', space=vmem, size = 0xc0000, scoped, tag = 'output window, operand 0']
    %7 = vsyncpa [#allocation3], 0
    %s8 = scalar_lea.sflag [#allocation3], 1
    %9 = vsyncpa %s8, 0
    %10 = vsyncpa [#allocation5], 0
    loop: start=0, step=1, limit=4
    $region2: #{tpu_custom_call.1} parent=1 // loop_pre_header
      _
    $region3: #{tpu_custom_call.1} parent=1 // loop_header
      %s12 = sphi 0, %s16
      %p13 = scmp.ge.s32.totalorder %s12, 4
      %s22 = sphi 0, %s24
      %s25 = sphi 0, %s22
      %s26 = sphi 0, %s25
      %s42 = sphi 0, %s26
      %s46 = sphi 0, %s46
      %s48 = sphi 0, %s46
      %s49 = sphi 0, %s48
      %s63 = sphi 0, %s49
      %s69 = sphi 0, %s71
      %s72 = sphi 0, %s69
      %s73 = sphi 0, %s72
      %s89 = sphi 0, %s73
    $region4: #{tpu_custom_call.1} parent=1 // loop_header_branch
      %15 = sbr.rel (%p13) target = $region8
    $region5: #{tpu_custom_call.1} parent=1 // loop_body
      %s17 = ssub.s32 %s12, 1
      %s18 = ssub.s32 %s12, 2
      %s19 = sadd.s32 %s12, 1
      %s20 = ssub.s32 %s12, %s19
      %p21 = scmp.eq.s32.totalorder %s20, 0
      %s23 = sadd.s32 %s22, 1
      %s24 = scalar_select %p21, %s22, %s23
      %p27 = pneg %p21
      %p28 = scmp.eq.s32.totalorder %s12, 1
      %p29 = por %p27, %p28
      %p30 = scmp.ne.s32.totalorder %s22, %s25
      %p31 = scmp.eq.s32.totalorder %s12, 0
      %p32 = por %p30, %p31
      %p33 = scmp.ne.s32.totalorder %s22, %s25
      %p34 = scmp.eq.s32.totalorder %s17, 1
      %p35 = por %p33, %p34
      %p36 = scmp.ne.s32.totalorder %s25, %s26
      %p37 = scmp.eq.s32.totalorder %s17, 0
      %p38 = por %p36, %p37
      %p39 = scmp.ne.s32.totalorder %s25, %s26
      %p40 = scmp.eq.s32.totalorder %s18, 1
      %p41 = por %p39, %p40
      %p43 = scmp.ne.s32.totalorder %s26, %s42
      %p44 = scmp.eq.s32.totalorder %s18, 0
      %p45 = por %p43, %p44
      %s47 = sadd.s32 %s46, 1
      %p50 = scmp.eq.s32.totalorder %s12, 1
      %p51 = scmp.ne.s32.totalorder %s46, %s48
      %p52 = scmp.eq.s32.totalorder %s12, 0
      %p53 = por %p51, %p52
      %p54 = scmp.ne.s32.totalorder %s46, %s48
      %p55 = scmp.eq.s32.totalorder %s17, 1
      %p56 = por %p54, %p55
      %p57 = scmp.ne.s32.totalorder %s48, %s49
      %p58 = scmp.eq.s32.totalorder %s17, 0
      %p59 = por %p57, %p58
      %p60 = scmp.ne.s32.totalorder %s48, %s49
      %p61 = scmp.eq.s32.totalorder %s18, 1
      %p62 = por %p60, %p61
      %p64 = scmp.ne.s32.totalorder %s49, %s63
      %p65 = scmp.eq.s32.totalorder %s18, 0
      %p66 = por %p64, %p65
      %s67 = ssub.s32 %s12, %s19
      %p68 = scmp.eq.s32.totalorder %s67, 0
      %s70 = sadd.s32 %s69, 1
      %s71 = scalar_select %p68, %s69, %s70
      %p74 = pneg %p68
      %p75 = scmp.eq.s32.totalorder %s12, 1
      %p76 = por %p74, %p75
      %p77 = scmp.ne.s32.totalorder %s69, %s72
      %p78 = scmp.eq.s32.totalorder %s12, 0
      %p79 = por %p77, %p78
      %p80 = scmp.ne.s32.totalorder %s69, %s72
      %p81 = scmp.eq.s32.totalorder %s17, 1
      %p82 = por %p80, %p81
      %p83 = scmp.ne.s32.totalorder %s72, %s73
      %p84 = scmp.eq.s32.totalorder %s17, 0
      %p85 = por %p83, %p84
      %p86 = scmp.ne.s32.totalorder %s72, %s73
      %p87 = scmp.eq.s32.totalorder %s18, 1
      %p88 = por %p86, %p87
      %p90 = scmp.ne.s32.totalorder %s73, %s89
      %p91 = scmp.eq.s32.totalorder %s18, 0
      %p92 = por %p90, %p91
      %p93 = scmp.le.s32.totalorder 1, %s12
      %p94 = scmp.lt.s32.totalorder %s12, 3
      %p95 = pnand %p93, %p94
      %p96 = pneg %p95
      // Predicated region
      $region9: #{tpu_custom_call.1} parent=5 // pred_check
        _
      $region10: #{tpu_custom_call.1} parent=5 // pred_check_branch
        %98 = sbr.rel (%p95) target = $region12
      $region11: #{tpu_custom_call.1} parent=5 // pred_region
        %s99 = ssub.s32 %s12, 1
        // Predicated region
        $region13: #{tpu_custom_call.1} parent=11 // pred_check
          %p100 = pneg %p59
        $region14: #{tpu_custom_call.1} parent=11 // pred_check_branch
          %102 = sbr.rel (%p100) target = $region16
        $region15: #{tpu_custom_call.1} parent=11 // pred_region
          %104 = vsyncadd [#allocation5], 0
          %s106 = sshll.u32 %s1, 4
          %s107 = int_to_ptr.hbm [resolvable:$true] %s106
          %s108 = sshll.u32 [#allocation4], 4
          %s109 = int_to_ptr.vmem [resolvable:$true] %s108
          %111 = dma.hbm_to_vmem [thread:$0]  %s107, 32, %s109, [#allocation5]
        $region16: #{tpu_custom_call.1} parent=11 // pred_fallthru
          _
      $region12: #{tpu_custom_call.1} parent=5 // pred_fallthru
        _
      %p112 = scmp.lt.s32.totalorder %s12, 2
      // Predicated region
      $region17: #{tpu_custom_call.1} parent=5 // pred_check
        %p113 = pneg %p112
      $region18: #{tpu_custom_call.1} parent=5 // pred_check_branch
        %115 = sbr.rel (%p113) target = $region20
      $region19: #{tpu_custom_call.1} parent=5 // pred_region
        // Predicated region
        $region21: #{tpu_custom_call.1} parent=19 // pred_check
          %p116 = pneg %p32
        $region22: #{tpu_custom_call.1} parent=19 // pred_check_branch
          %118 = sbr.rel (%p116) target = $region24
        $region23: #{tpu_custom_call.1} parent=19 // pred_region
          %s119 = sand.u32 %s22, 1
          %s120 = scalar_lea.sflag [#allocation3], %s119
          %s121 = sand.u32 %s22, 1
          %s122 = smul.addr %s121, 256
          %s123 = scalar_lea.vmem [#allocation2], %s122
          %s124 = smul.u32 32, %s12
          %s125 = ssub.s32 63, %s124
          %p126 = scmp.lt.s32.totalorder %s125, 32
          %s127 = scalar_select %p126, %s125, 32
          %s128 = smul.u32 8, %s127
          %s129 = ssub.s32 256, %s128
          %s130 = sshll.u32 %s129, 4
          %131 = vsyncadd %s120, %s130
          %p132 = scmp.ne.s32.totalorder 0, %s128
          %s133 = smul.addr %s124, 8
          %s134 = scalar_lea.hbm %s0, %s133
          %s135 = smul.u32 8, %s127
          %s136 = sshll.u32 %s134, 4
          %s137 = int_to_ptr.hbm [resolvable:$true] %s136
          %s138 = sshll.u32 %s123, 4
          %s139 = int_to_ptr.vmem [resolvable:$true] %s138
          %s140 = sshll.u32 %s135, 4
          %144 = dma.hbm_to_vmem [thread:$0]  (%p132), %s137, %s140, %s139, %s120, 128, 128, 8
        $region24: #{tpu_custom_call.1} parent=19 // pred_fallthru
          _
      $region20: #{tpu_custom_call.1} parent=5 // pred_fallthru
        _
      %p145 = scmp.le.s32.totalorder 1, %s12
      %p146 = scmp.lt.s32.totalorder %s12, 3
      %p147 = pnand %p145, %p146
      %p148 = pneg %p147
      // Predicated region
      $region25: #{tpu_custom_call.1} parent=5 // pred_check
        _
      $region26: #{tpu_custom_call.1} parent=5 // pred_check_branch
        %150 = sbr.rel (%p147) target = $region28
      $region27: #{tpu_custom_call.1} parent=5 // pred_region
        %s151 = ssub.s32 %s12, 1
        %s152 = sand.u32 %s25, 1
        %s153 = scalar_lea.sflag [#allocation3], %s152
        %s154 = sand.u32 %s25, 1
        %s155 = smul.addr %s154, 256
        %s156 = scalar_lea.vmem [#allocation2], %s155
        // Predicated region
        $region29: #{tpu_custom_call.1} parent=27 // pred_check
          %p157 = pneg %p38
        $region30: #{tpu_custom_call.1} parent=27 // pred_check_branch
          %159 = sbr.rel (%p157) target = $region32
        $region31: #{tpu_custom_call.1} parent=27 // pred_region
          %161 = dma.done %s153, 4096
        $region32: #{tpu_custom_call.1} parent=27 // pred_fallthru
          _
        // Predicated region
        $region33: #{tpu_custom_call.1} parent=27 // pred_check
          %p162 = pneg %p59
        $region34: #{tpu_custom_call.1} parent=27 // pred_check_branch
          %164 = sbr.rel (%p162) target = $region36
        $region35: #{tpu_custom_call.1} parent=27 // pred_region
          %166 = dma.done [#allocation5], 32
        $region36: #{tpu_custom_call.1} parent=27 // pred_fallthru
          _
        %s167 = sand.u32 %s25, 1
        %s168 = scalar_lea.sflag [#allocation3], %s167
        %s169 = sand.u32 %s25, 1
        %s170 = smul.addr %s169, 256
        %s171 = scalar_lea.vmem [#allocation2], %s170
        %p172 = pneg %p38
        %p173 = pneg %p35
        %p174 = pneg %p59
        %p175 = pneg %p56
        %p176 = pneg %p85
        %p177 = pneg %p82
        %s178 = sand.u32 %s72, 1
        %s179 = sand.u32 %s72, 1
        %s180 = smul.addr %s179, 768
        %s181 = scalar_lea.vmem [#allocation6], %s180
        %s182 = smul.u32 32, %s17
        %s183 = ssub.s32 63, %s182
        %p184 = scmp.lt.s32.totalorder %s183, 32
        %s185 = scalar_select %p184, %s183, 32
        %s186 = smul.u32 8, %s185
        %s187 = smul.u32 32, %s17
        %s188 = ssub.s32 63, %s187
        %p189 = scmp.lt.s32.totalorder %s188, 32
        %s190 = scalar_select %p189, %s188, 32
        %s191 = smul.u32 8, %s190
        %s192 = smul.u32 %s191, 3
        %v193 = vld [vmem:[%s156] sm:$0xff]
        %v194 = vld [vmem:[%s156 + $0x8] sm:$0xff]
        %v195 = vld [vmem:[%s156 + $0x10] sm:$0xff]
        %v196 = vld [vmem:[%s156 + $0x18] sm:$0xff]
        %v197 = vld [vmem:[%s156 + $0x20] sm:$0xff]
        %v198 = vld [vmem:[%s156 + $0x28] sm:$0xff]
        %v199 = vld [vmem:[%s156 + $0x30] sm:$0xff]
        %v200 = vld [vmem:[%s156 + $0x38] sm:$0xff]
        %v201 = vld [vmem:[%s156 + $0x40] sm:$0xff]
        %v202 = vld [vmem:[%s156 + $0x48] sm:$0xff]
        %v203 = vld [vmem:[%s156 + $0x50] sm:$0xff]
        %v204 = vld [vmem:[%s156 + $0x58] sm:$0xff]
        %v205 = vld [vmem:[%s156 + $0x60] sm:$0xff]
        %v206 = vld [vmem:[%s156 + $0x68] sm:$0xff]
        %v207 = vld [vmem:[%s156 + $0x70] sm:$0xff]
        %v208 = vld [vmem:[%s156 + $0x78] sm:$0xff]
        %v209 = vld [vmem:[%s156 + $0x80] sm:$0xff]
        %v210 = vld [vmem:[%s156 + $0x88] sm:$0xff]
        %v211 = vld [vmem:[%s156 + $0x90] sm:$0xff]
        %v212 = vld [vmem:[%s156 + $0x98] sm:$0xff]
        %v213 = vld [vmem:[%s156 + $0xa0] sm:$0xff]
        %v214 = vld [vmem:[%s156 + $0xa8] sm:$0xff]
        %v215 = vld [vmem:[%s156 + $0xb0] sm:$0xff]
        %v216 = vld [vmem:[%s156 + $0xb8] sm:$0xff]
        %v217 = vld [vmem:[%s156 + $0xc0] sm:$0xff]
        %v218 = vld [vmem:[%s156 + $0xc8] sm:$0xff]
        %v219 = vld [vmem:[%s156 + $0xd0] sm:$0xff]
        %v220 = vld [vmem:[%s156 + $0xd8] sm:$0xff]
        %v221 = vld [vmem:[%s156 + $0xe0] sm:$0xff]
        %v222 = vld [vmem:[%s156 + $0xe8] sm:$0xff]
        %v223 = vld [vmem:[%s156 + $0xf0] sm:$0xff]
        %v224 = vld [vmem:[%s156 + $0xf8] sm:$0xff]
        %225 = vst [vmem:[%s181] sm:$0xff] %v193
        %226 = vst [vmem:[%s181 + $0x18] sm:$0xff] %v194
        %227 = vst [vmem:[%s181 + $0x30] sm:$0xff] %v195
        %228 = vst [vmem:[%s181 + $0x48] sm:$0xff] %v196
        %229 = vst [vmem:[%s181 + $0x60] sm:$0xff] %v197
        %230 = vst [vmem:[%s181 + $0x78] sm:$0xff] %v198
        %231 = vst [vmem:[%s181 + $0x90] sm:$0xff] %v199
        %232 = vst [vmem:[%s181 + $0xa8] sm:$0xff] %v200
        %233 = vst [vmem:[%s181 + $0xc0] sm:$0xff] %v201
        %234 = vst [vmem:[%s181 + $0xd8] sm:$0xff] %v202
        %235 = vst [vmem:[%s181 + $0xf0] sm:$0xff] %v203
        %236 = vst [vmem:[%s181 + $0x108] sm:$0xff] %v204
        %237 = vst [vmem:[%s181 + $0x120] sm:$0xff] %v205
        %238 = vst [vmem:[%s181 + $0x138] sm:$0xff] %v206
        %239 = vst [vmem:[%s181 + $0x150] sm:$0xff] %v207
        %240 = vst [vmem:[%s181 + $0x168] sm:$0xff] %v208
        %241 = vst [vmem:[%s181 + $0x180] sm:$0xff] %v209
        %242 = vst [vmem:[%s181 + $0x198] sm:$0xff] %v210
        %243 = vst [vmem:[%s181 + $0x1b0] sm:$0xff] %v211
        %244 = vst [vmem:[%s181 + $0x1c8] sm:$0xff] %v212
        %245 = vst [vmem:[%s181 + $0x1e0] sm:$0xff] %v213
        %246 = vst [vmem:[%s181 + $0x1f8] sm:$0xff] %v214
        %247 = vst [vmem:[%s181 + $0x210] sm:$0xff] %v215
        %248 = vst [vmem:[%s181 + $0x228] sm:$0xff] %v216
        %249 = vst [vmem:[%s181 + $0x240] sm:$0xff] %v217
        %250 = vst [vmem:[%s181 + $0x258] sm:$0xff] %v218
        %251 = vst [vmem:[%s181 + $0x270] sm:$0xff] %v219
        %252 = vst [vmem:[%s181 + $0x288] sm:$0xff] %v220
        %253 = vst [vmem:[%s181 + $0x2a0] sm:$0xff] %v221
        %254 = vst [vmem:[%s181 + $0x2b8] sm:$0xff] %v222
        %255 = vst [vmem:[%s181 + $0x2d0] sm:$0xff] %v223
        %256 = vst [vmem:[%s181 + $0x2e8] sm:$0xff] %v224
        %v257 = vld [vmem:[#allocation4] sm:$0x3]
        %v258 = vlaneseq
        %v259 = vshrl.u32 %v258, 7
        %v260 = vadd.s32 %v259, 8
        %v261 = vadd.s32 %v259, 16
        %v262 = vadd.s32 %v259, 24
        %v263 = vadd.s32 %v259, 32
        %v264 = vadd.s32 %v259, 40
        %v265 = vadd.s32 %v259, 48
        %v266 = vadd.s32 %v259, 56
        %v267 = vadd.s32 %v259, 64
        %v268 = vadd.s32 %v259, 72
        %v269 = vadd.s32 %v259, 80
        %v270 = vadd.s32 %v259, 88
        %v271 = vadd.s32 %v259, 96
        %v272 = vadd.s32 %v259, 104
        %v273 = vadd.s32 %v259, 112
        %v274 = vadd.s32 %v259, 120
        %v275 = vperm.slane %v257, 0
        %v276 = vperm.slane %v257, 1
        %vm277 = vcmp.eq.s32.totalorder %v259, %v275
        %vm278 = vcmp.eq.s32.totalorder %v259, %v276
        %vm279 = vcmp.eq.s32.totalorder %v260, %v275
        %vm280 = vcmp.eq.s32.totalorder %v260, %v276
        %vm281 = vcmp.eq.s32.totalorder %v261, %v275
        %vm282 = vcmp.eq.s32.totalorder %v261, %v276
        %vm283 = vcmp.eq.s32.totalorder %v262, %v275
        %vm284 = vcmp.eq.s32.totalorder %v262, %v276
        %vm285 = vcmp.eq.s32.totalorder %v263, %v275
        %vm286 = vcmp.eq.s32.totalorder %v263, %v276
        %vm287 = vcmp.eq.s32.totalorder %v264, %v275
        %vm288 = vcmp.eq.s32.totalorder %v264, %v276
        %vm289 = vcmp.eq.s32.totalorder %v265, %v275
        %vm290 = vcmp.eq.s32.totalorder %v265, %v276
        %vm291 = vcmp.eq.s32.totalorder %v266, %v275
        %vm292 = vcmp.eq.s32.totalorder %v266, %v276
        %vm293 = vcmp.eq.s32.totalorder %v267, %v275
        %vm294 = vcmp.eq.s32.totalorder %v267, %v276
        %vm295 = vcmp.eq.s32.totalorder %v268, %v275
        %vm296 = vcmp.eq.s32.totalorder %v268, %v276
        %vm297 = vcmp.eq.s32.totalorder %v269, %v275
        %vm298 = vcmp.eq.s32.totalorder %v269, %v276
        %vm299 = vcmp.eq.s32.totalorder %v270, %v275
        %vm300 = vcmp.eq.s32.totalorder %v270, %v276
        %vm301 = vcmp.eq.s32.totalorder %v271, %v275
        %vm302 = vcmp.eq.s32.totalorder %v271, %v276
        %vm303 = vcmp.eq.s32.totalorder %v272, %v275
        %vm304 = vcmp.eq.s32.totalorder %v272, %v276
        %vm305 = vcmp.eq.s32.totalorder %v273, %v275
        %vm306 = vcmp.eq.s32.totalorder %v273, %v276
        %vm307 = vcmp.eq.s32.totalorder %v274, %v275
        %vm308 = vcmp.eq.s32.totalorder %v274, %v276
        %v309 = vsel %vm277, 1, 0
        %v310 = vsel %vm278, 1, 0
        %v311 = vsel %vm279, 1, 0
        %v312 = vsel %vm280, 1, 0
        %v313 = vsel %vm281, 1, 0
        %v314 = vsel %vm282, 1, 0
        %v315 = vsel %vm283, 1, 0
        %v316 = vsel %vm284, 1, 0
        %v317 = vsel %vm285, 1, 0
        %v318 = vsel %vm286, 1, 0
        %v319 = vsel %vm287, 1, 0
        %v320 = vsel %vm288, 1, 0
        %v321 = vsel %vm289, 1, 0
        %v322 = vsel %vm290, 1, 0
        %v323 = vsel %vm291, 1, 0
        %v324 = vsel %vm292, 1, 0
        %v325 = vsel %vm293, 1, 0
        %v326 = vsel %vm294, 1, 0
        %v327 = vsel %vm295, 1, 0
        %v328 = vsel %vm296, 1, 0
        %v329 = vsel %vm297, 1, 0
        %v330 = vsel %vm298, 1, 0
        %v331 = vsel %vm299, 1, 0
        %v332 = vsel %vm300, 1, 0
        %v333 = vsel %vm301, 1, 0
        %v334 = vsel %vm302, 1, 0
        %v335 = vsel %vm303, 1, 0
        %v336 = vsel %vm304, 1, 0
        %v337 = vsel %vm305, 1, 0
        %v338 = vsel %vm306, 1, 0
        %v339 = vsel %vm307, 1, 0
        %v340 = vsel %vm308, 1, 0
        %v341 = vcvt.s32.f32 %v309
        %v342 = vcvt.s32.f32 %v310
        %v343 = vcvt.s32.f32 %v311
        %v344 = vcvt.s32.f32 %v312
        %v345 = vcvt.s32.f32 %v313
        %v346 = vcvt.s32.f32 %v314
        %v347 = vcvt.s32.f32 %v315
        %v348 = vcvt.s32.f32 %v316
        %v349 = vcvt.s32.f32 %v317
        %v350 = vcvt.s32.f32 %v318
        %v351 = vcvt.s32.f32 %v319
        %v352 = vcvt.s32.f32 %v320
        %v353 = vcvt.s32.f32 %v321
        %v354 = vcvt.s32.f32 %v322
        %v355 = vcvt.s32.f32 %v323
        %v356 = vcvt.s32.f32 %v324
        %v357 = vcvt.s32.f32 %v325
        %v358 = vcvt.s32.f32 %v326
        %v359 = vcvt.s32.f32 %v327
        %v360 = vcvt.s32.f32 %v328
        %v361 = vcvt.s32.f32 %v329
        %v362 = vcvt.s32.f32 %v330
        %v363 = vcvt.s32.f32 %v331
        %v364 = vcvt.s32.f32 %v332
        %v365 = vcvt.s32.f32 %v333
        %v366 = vcvt.s32.f32 %v334
        %v367 = vcvt.s32.f32 %v335
        %v368 = vcvt.s32.f32 %v336
        %v369 = vcvt.s32.f32 %v337
        %v370 = vcvt.s32.f32 %v338
        %v371 = vcvt.s32.f32 %v339
        %v372 = vcvt.s32.f32 %v340
        %373 = vmatpush.msra.mxu0 %v371
        %374 = vmatpush.msra.mxu0 %v369
        %375 = vmatpush.msra.mxu0 %v367
        %376 = vmatpush.msra.mxu0 %v365
        %377 = vmatpush.msra.mxu0 %v363
        %378 = vmatpush.msra.mxu0 %v361
        %379 = vmatpush.msra.mxu0 %v359
        %380 = vmatpush.msra.mxu0 %v357
        %381 = vmatpush.msra.mxu0 %v355
        %382 = vmatpush.msra.mxu0 %v353
        %383 = vmatpush.msra.mxu0 %v351
        %384 = vmatpush.msra.mxu0 %v349
        %385 = vmatpush.msra.mxu0 %v347
        %386 = vmatpush.msra.mxu0 %v345
        %387 = vmatpush.msra.mxu0 %v343
        %388 = vmatpush.msra.mxu0 %v341
        %389 = vmatmul.f32.gmra.mxu0 %v193
        %v390 = vpop.f32.mrf.mxu0
        %v391 = vadd.f32 0.0, %v390
        %392 = vmatmul.f32.gmra.mxu0 %v194
        %v393 = vpop.f32.mrf.mxu0
        %v394 = vadd.f32 0.0, %v393
        %395 = vmatmul.f32.gmra.mxu0 %v195
        %v396 = vpop.f32.mrf.mxu0
        %v397 = vadd.f32 0.0, %v396
        %398 = vmatmul.f32.gmra.mxu0 %v196
        %v399 = vpop.f32.mrf.mxu0
        %v400 = vadd.f32 0.0, %v399
        %401 = vmatmul.f32.gmra.mxu0 %v197
        %v402 = vpop.f32.mrf.mxu0
        %v403 = vadd.f32 0.0, %v402
        %404 = vmatmul.f32.gmra.mxu0 %v198
        %v405 = vpop.f32.mrf.mxu0
        %v406 = vadd.f32 0.0, %v405
        %407 = vmatmul.f32.gmra.mxu0 %v199
        %v408 = vpop.f32.mrf.mxu0
        %v409 = vadd.f32 0.0, %v408
        %410 = vmatmul.f32.gmra.mxu0 %v200
        %v411 = vpop.f32.mrf.mxu0
        %v412 = vadd.f32 0.0, %v411
        %413 = vmatmul.f32.gmra.mxu0 %v201
        %v414 = vpop.f32.mrf.mxu0
        %v415 = vadd.f32 0.0, %v414
        %416 = vmatmul.f32.gmra.mxu0 %v202
        %v417 = vpop.f32.mrf.mxu0
        %v418 = vadd.f32 0.0, %v417
        %419 = vmatmul.f32.gmra.mxu0 %v203
        %v420 = vpop.f32.mrf.mxu0
        %v421 = vadd.f32 0.0, %v420
        %422 = vmatmul.f32.gmra.mxu0 %v204
        %v423 = vpop.f32.mrf.mxu0
        %v424 = vadd.f32 0.0, %v423
        %425 = vmatmul.f32.gmra.mxu0 %v205
        %v426 = vpop.f32.mrf.mxu0
        %v427 = vadd.f32 0.0, %v426
        %428 = vmatmul.f32.gmra.mxu0 %v206
        %v429 = vpop.f32.mrf.mxu0
        %v430 = vadd.f32 0.0, %v429
        %431 = vmatmul.f32.gmra.mxu0 %v207
        %v432 = vpop.f32.mrf.mxu0
        %v433 = vadd.f32 0.0, %v432
        %434 = vmatmul.f32.gmra.mxu0 %v208
        %v435 = vpop.f32.mrf.mxu0
        %v436 = vadd.f32 0.0, %v435
        %437 = vmatmul.f32.gmra.mxu0 %v209
        %v438 = vpop.f32.mrf.mxu0
        %v439 = vadd.f32 0.0, %v438
        %440 = vmatmul.f32.gmra.mxu0 %v210
        %v441 = vpop.f32.mrf.mxu0
        %v442 = vadd.f32 0.0, %v441
        %443 = vmatmul.f32.gmra.mxu0 %v211
        %v444 = vpop.f32.mrf.mxu0
        %v445 = vadd.f32 0.0, %v444
        %446 = vmatmul.f32.gmra.mxu0 %v212
        %v447 = vpop.f32.mrf.mxu0
        %v448 = vadd.f32 0.0, %v447
        %449 = vmatmul.f32.gmra.mxu0 %v213
        %v450 = vpop.f32.mrf.mxu0
        %v451 = vadd.f32 0.0, %v450
        %452 = vmatmul.f32.gmra.mxu0 %v214
        %v453 = vpop.f32.mrf.mxu0
        %v454 = vadd.f32 0.0, %v453
        %455 = vmatmul.f32.gmra.mxu0 %v215
        %v456 = vpop.f32.mrf.mxu0
        %v457 = vadd.f32 0.0, %v456
        %458 = vmatmul.f32.gmra.mxu0 %v216
        %v459 = vpop.f32.mrf.mxu0
        %v460 = vadd.f32 0.0, %v459
        %461 = vmatmul.f32.gmra.mxu0 %v217
        %v462 = vpop.f32.mrf.mxu0
        %v463 = vadd.f32 0.0, %v462
        %464 = vmatmul.f32.gmra.mxu0 %v218
        %v465 = vpop.f32.mrf.mxu0
        %v466 = vadd.f32 0.0, %v465
        %467 = vmatmul.f32.gmra.mxu0 %v219
        %v468 = vpop.f32.mrf.mxu0
        %v469 = vadd.f32 0.0, %v468
        %470 = vmatmul.f32.gmra.mxu0 %v220
        %v471 = vpop.f32.mrf.mxu0
        %v472 = vadd.f32 0.0, %v471
        %473 = vmatmul.f32.gmra.mxu0 %v221
        %v474 = vpop.f32.mrf.mxu0
        %v475 = vadd.f32 0.0, %v474
        %476 = vmatmul.f32.gmra.mxu0 %v222
        %v477 = vpop.f32.mrf.mxu0
        %v478 = vadd.f32 0.0, %v477
        %479 = vmatmul.f32.gmra.mxu0 %v223
        %v480 = vpop.f32.mrf.mxu0
        %v481 = vadd.f32 0.0, %v480
        %482 = vmatmul.f32.gmra.mxu0 %v224
        %v483 = vpop.f32.mrf.mxu0
        %v484 = vadd.f32 0.0, %v483
        %485 = vdwg.mxu0
        %486 = vmatpush.msra.mxu0 %v372
        %487 = vmatpush.msra.mxu0 %v370
        %488 = vmatpush.msra.mxu0 %v368
        %489 = vmatpush.msra.mxu0 %v366
        %490 = vmatpush.msra.mxu0 %v364
        %491 = vmatpush.msra.mxu0 %v362
        %492 = vmatpush.msra.mxu0 %v360
        %493 = vmatpush.msra.mxu0 %v358
        %494 = vmatpush.msra.mxu0 %v356
        %495 = vmatpush.msra.mxu0 %v354
        %496 = vmatpush.msra.mxu0 %v352
        %497 = vmatpush.msra.mxu0 %v350
        %498 = vmatpush.msra.mxu0 %v348
        %499 = vmatpush.msra.mxu0 %v346
        %500 = vmatpush.msra.mxu0 %v344
        %501 = vmatpush.msra.mxu0 %v342
        %502 = vmatmul.f32.gmra.mxu0 %v193
        %v503 = vpop.f32.mrf.mxu0
        %v504 = vadd.f32 0.0, %v503
        %505 = vmatmul.f32.gmra.mxu0 %v194
        %v506 = vpop.f32.mrf.mxu0
        %v507 = vadd.f32 0.0, %v506
        %508 = vmatmul.f32.gmra.mxu0 %v195
        %v509 = vpop.f32.mrf.mxu0
        %v510 = vadd.f32 0.0, %v509
        %511 = vmatmul.f32.gmra.mxu0 %v196
        %v512 = vpop.f32.mrf.mxu0
        %v513 = vadd.f32 0.0, %v512
        %514 = vmatmul.f32.gmra.mxu0 %v197
        %v515 = vpop.f32.mrf.mxu0
        %v516 = vadd.f32 0.0, %v515
        %517 = vmatmul.f32.gmra.mxu0 %v198
        %v518 = vpop.f32.mrf.mxu0
        %v519 = vadd.f32 0.0, %v518
        %520 = vmatmul.f32.gmra.mxu0 %v199
        %v521 = vpop.f32.mrf.mxu0
        %v522 = vadd.f32 0.0, %v521
        %523 = vmatmul.f32.gmra.mxu0 %v200
        %v524 = vpop.f32.mrf.mxu0
        %v525 = vadd.f32 0.0, %v524
        %526 = vmatmul.f32.gmra.mxu0 %v201
        %v527 = vpop.f32.mrf.mxu0
        %v528 = vadd.f32 0.0, %v527
        %529 = vmatmul.f32.gmra.mxu0 %v202
        %v530 = vpop.f32.mrf.mxu0
        %v531 = vadd.f32 0.0, %v530
        %532 = vmatmul.f32.gmra.mxu0 %v203
        %v533 = vpop.f32.mrf.mxu0
        %v534 = vadd.f32 0.0, %v533
        %535 = vmatmul.f32.gmra.mxu0 %v204
        %v536 = vpop.f32.mrf.mxu0
        %v537 = vadd.f32 0.0, %v536
        %538 = vmatmul.f32.gmra.mxu0 %v205
        %v539 = vpop.f32.mrf.mxu0
        %v540 = vadd.f32 0.0, %v539
        %541 = vmatmul.f32.gmra.mxu0 %v206
        %v542 = vpop.f32.mrf.mxu0
        %v543 = vadd.f32 0.0, %v542
        %544 = vmatmul.f32.gmra.mxu0 %v207
        %v545 = vpop.f32.mrf.mxu0
        %v546 = vadd.f32 0.0, %v545
        %547 = vmatmul.f32.gmra.mxu0 %v208
        %v548 = vpop.f32.mrf.mxu0
        %v549 = vadd.f32 0.0, %v548
        %550 = vmatmul.f32.gmra.mxu0 %v209
        %v551 = vpop.f32.mrf.mxu0
        %v552 = vadd.f32 0.0, %v551
        %553 = vmatmul.f32.gmra.mxu0 %v210
        %v554 = vpop.f32.mrf.mxu0
        %v555 = vadd.f32 0.0, %v554
        %556 = vmatmul.f32.gmra.mxu0 %v211
        %v557 = vpop.f32.mrf.mxu0
        %v558 = vadd.f32 0.0, %v557
        %559 = vmatmul.f32.gmra.mxu0 %v212
        %v560 = vpop.f32.mrf.mxu0
        %v561 = vadd.f32 0.0, %v560
        %562 = vmatmul.f32.gmra.mxu0 %v213
        %v563 = vpop.f32.mrf.mxu0
        %v564 = vadd.f32 0.0, %v563
        %565 = vmatmul.f32.gmra.mxu0 %v214
        %v566 = vpop.f32.mrf.mxu0
        %v567 = vadd.f32 0.0, %v566
        %568 = vmatmul.f32.gmra.mxu0 %v215
        %v569 = vpop.f32.mrf.mxu0
        %v570 = vadd.f32 0.0, %v569
        %571 = vmatmul.f32.gmra.mxu0 %v216
        %v572 = vpop.f32.mrf.mxu0
        %v573 = vadd.f32 0.0, %v572
        %574 = vmatmul.f32.gmra.mxu0 %v217
        %v575 = vpop.f32.mrf.mxu0
        %v576 = vadd.f32 0.0, %v575
        %577 = vmatmul.f32.gmra.mxu0 %v218
        %v578 = vpop.f32.mrf.mxu0
        %v579 = vadd.f32 0.0, %v578
        %580 = vmatmul.f32.gmra.mxu0 %v219
        %v581 = vpop.f32.mrf.mxu0
        %v582 = vadd.f32 0.0, %v581
        %583 = vmatmul.f32.gmra.mxu0 %v220
        %v584 = vpop.f32.mrf.mxu0
        %v585 = vadd.f32 0.0, %v584
        %586 = vmatmul.f32.gmra.mxu0 %v221
        %v587 = vpop.f32.mrf.mxu0
        %v588 = vadd.f32 0.0, %v587
        %589 = vmatmul.f32.gmra.mxu0 %v222
        %v590 = vpop.f32.mrf.mxu0
        %v591 = vadd.f32 0.0, %v590
        %592 = vmatmul.f32.gmra.mxu0 %v223
        %v593 = vpop.f32.mrf.mxu0
        %v594 = vadd.f32 0.0, %v593
        %595 = vmatmul.f32.gmra.mxu0 %v224
        %v596 = vpop.f32.mrf.mxu0
        %v597 = vadd.f32 0.0, %v596
        %598 = vdwg.mxu0
        %599 = vst [vmem:[%s181 + $0x8] sm:$0xff] %v391
        %vm600 = vcmask 523264
        %601 = vst.msk [vmem:[%s181 + $0x10] sm:$0xff] %vm600, %v504
        %602 = vst [vmem:[%s181 + $0x20] sm:$0xff] %v394
        %603 = vst.msk [vmem:[%s181 + $0x28] sm:$0xff] %vm600, %v507
        %604 = vst [vmem:[%s181 + $0x38] sm:$0xff] %v397
        %605 = vst.msk [vmem:[%s181 + $0x40] sm:$0xff] %vm600, %v510
        %606 = vst [vmem:[%s181 + $0x50] sm:$0xff] %v400
        %607 = vst.msk [vmem:[%s181 + $0x58] sm:$0xff] %vm600, %v513
        %608 = vst [vmem:[%s181 + $0x68] sm:$0xff] %v403
        %609 = vst.msk [vmem:[%s181 + $0x70] sm:$0xff] %vm600, %v516
        %610 = vst [vmem:[%s181 + $0x80] sm:$0xff] %v406
        %611 = vst.msk [vmem:[%s181 + $0x88] sm:$0xff] %vm600, %v519
        %612 = vst [vmem:[%s181 + $0x98] sm:$0xff] %v409
        %613 = vst.msk [vmem:[%s181 + $0xa0] sm:$0xff] %vm600, %v522
        %614 = vst [vmem:[%s181 + $0xb0] sm:$0xff] %v412
        %615 = vst.msk [vmem:[%s181 + $0xb8] sm:$0xff] %vm600, %v525
        %616 = vst [vmem:[%s181 + $0xc8] sm:$0xff] %v415
        %617 = vst.msk [vmem:[%s181 + $0xd0] sm:$0xff] %vm600, %v528
        %618 = vst [vmem:[%s181 + $0xe0] sm:$0xff] %v418
        %619 = vst.msk [vmem:[%s181 + $0xe8] sm:$0xff] %vm600, %v531
        %620 = vst [vmem:[%s181 + $0xf8] sm:$0xff] %v421
        %621 = vst.msk [vmem:[%s181 + $0x100] sm:$0xff] %vm600, %v534
        %622 = vst [vmem:[%s181 + $0x110] sm:$0xff] %v424
        %623 = vst.msk [vmem:[%s181 + $0x118] sm:$0xff] %vm600, %v537
        %624 = vst [vmem:[%s181 + $0x128] sm:$0xff] %v427
        %625 = vst.msk [vmem:[%s181 + $0x130] sm:$0xff] %vm600, %v540
        %626 = vst [vmem:[%s181 + $0x140] sm:$0xff] %v430
        %627 = vst.msk [vmem:[%s181 + $0x148] sm:$0xff] %vm600, %v543
        %628 = vst [vmem:[%s181 + $0x158] sm:$0xff] %v433
        %629 = vst.msk [vmem:[%s181 + $0x160] sm:$0xff] %vm600, %v546
        %630 = vst [vmem:[%s181 + $0x170] sm:$0xff] %v436
        %631 = vst.msk [vmem:[%s181 + $0x178] sm:$0xff] %vm600, %v549
        %632 = vst [vmem:[%s181 + $0x188] sm:$0xff] %v439
        %633 = vst.msk [vmem:[%s181 + $0x190] sm:$0xff] %vm600, %v552
        %634 = vst [vmem:[%s181 + $0x1a0] sm:$0xff] %v442
        %635 = vst.msk [vmem:[%s181 + $0x1a8] sm:$0xff] %vm600, %v555
        %636 = vst [vmem:[%s181 + $0x1b8] sm:$0xff] %v445
        %637 = vst.msk [vmem:[%s181 + $0x1c0] sm:$0xff] %vm600, %v558
        %638 = vst [vmem:[%s181 + $0x1d0] sm:$0xff] %v448
        %639 = vst.msk [vmem:[%s181 + $0x1d8] sm:$0xff] %vm600, %v561
        %640 = vst [vmem:[%s181 + $0x1e8] sm:$0xff] %v451
        %641 = vst.msk [vmem:[%s181 + $0x1f0] sm:$0xff] %vm600, %v564
        %642 = vst [vmem:[%s181 + $0x200] sm:$0xff] %v454
        %643 = vst.msk [vmem:[%s181 + $0x208] sm:$0xff] %vm600, %v567
        %644 = vst [vmem:[%s181 + $0x218] sm:$0xff] %v457
        %645 = vst.msk [vmem:[%s181 + $0x220] sm:$0xff] %vm600, %v570
        %646 = vst [vmem:[%s181 + $0x230] sm:$0xff] %v460
        %647 = vst.msk [vmem:[%s181 + $0x238] sm:$0xff] %vm600, %v573
        %648 = vst [vmem:[%s181 + $0x248] sm:$0xff] %v463
        %649 = vst.msk [vmem:[%s181 + $0x250] sm:$0xff] %vm600, %v576
        %650 = vst [vmem:[%s181 + $0x260] sm:$0xff] %v466
        %651 = vst.msk [vmem:[%s181 + $0x268] sm:$0xff] %vm600, %v579
        %652 = vst [vmem:[%s181 + $0x278] sm:$0xff] %v469
        %653 = vst.msk [vmem:[%s181 + $0x280] sm:$0xff] %vm600, %v582
        %654 = vst [vmem:[%s181 + $0x290] sm:$0xff] %v472
        %655 = vst.msk [vmem:[%s181 + $0x298] sm:$0xff] %vm600, %v585
        %656 = vst [vmem:[%s181 + $0x2a8] sm:$0xff] %v475
        %657 = vst.msk [vmem:[%s181 + $0x2b0] sm:$0xff] %vm600, %v588
        %658 = vst [vmem:[%s181 + $0x2c0] sm:$0xff] %v478
        %659 = vst.msk [vmem:[%s181 + $0x2c8] sm:$0xff] %vm600, %v591
        %660 = vst [vmem:[%s181 + $0x2d8] sm:$0xff] %v481
        %661 = vst.msk [vmem:[%s181 + $0x2e0] sm:$0xff] %vm600, %v594
        %662 = vst [vmem:[%s181 + $0x2f0] sm:$0xff] %v484
        %663 = vst.msk [vmem:[%s181 + $0x2f8] sm:$0xff] %vm600, %v597
        %s664 = sand.u32 %s72, 1
        %s665 = sand.u32 %s72, 1
        %s666 = smul.addr %s665, 768
        %s667 = scalar_lea.vmem [#allocation6], %s666
        // Predicated region
        $region37: #{tpu_custom_call.1} parent=27 // pred_check
          %p668 = pneg %p82
        $region38: #{tpu_custom_call.1} parent=27 // pred_check_branch
          %670 = sbr.rel (%p668) target = $region40
        $region39: #{tpu_custom_call.1} parent=27 // pred_region
          %s671 = smul.u32 32, %s17
          %s672 = ssub.s32 63, %s671
          %p673 = scmp.lt.s32.totalorder %s672, 32
          %s674 = scalar_select %p673, %s672, 32
          %s675 = smul.u32 8, %s674
          %s676 = smul.u32 %s675, 3
          %p677 = scmp.ne.s32.totalorder 0, %s676
          %s678 = smul.addr %s671, 3
          %s679 = smul.addr %s678, 8
          %s680 = scalar_lea.vmem %s2, %s679
          // Predicated region
          $region41: #{tpu_custom_call.1} parent=39 // pred_check
            %p681 = pneg %p677
          $region42: #{tpu_custom_call.1} parent=39 // pred_check_branch
            %683 = sbr.rel (%p681) target = $region44
          $region43: #{tpu_custom_call.1} parent=39 // pred_region
            // Predicated region
            $region45: #{tpu_custom_call.1} parent=43 // pred_check
              _
            $region46: #{tpu_custom_call.1} parent=43 // pred_check_branch
              %685 = sbr.rel (0) target = $region48
            $region47: #{tpu_custom_call.1} parent=43 // pred_region
              %s686 = sdiv.u32.pop %s674, 11
              %s687 = srem.u32.pop %s674, 11
              // While loop
              $region49: #{tpu_custom_call.1} parent=47 // loop_pre_header
                _
              $region50: #{tpu_custom_call.1} parent=47 // loop_header
                %s689 = sphi 0, %s691
                %p690 = scmp.ge.s32.totalorder %s689, %s686
                %s694 = sphi 0, %s765
                %s695 = sphi %s667, %s768
                %s696 = sphi %s680, %s769
              $region51: #{tpu_custom_call.1} parent=47 // loop_header_branch
                %693 = sbr.rel (%p690) target = $region55
              $region52: #{tpu_custom_call.1} parent=47 // loop_body
                %v697 = vld [vmem:[%s695] sm:$0xff]
                %698 = vst [vmem:[%s696] sm:$0xff] %v697
                %v699 = vld [vmem:[%s695 + $0x18] sm:$0xff]
                %700 = vst [vmem:[%s696 + $0x18] sm:$0xff] %v699
                %v701 = vld [vmem:[%s695 + $0x30] sm:$0xff]
                %702 = vst [vmem:[%s696 + $0x30] sm:$0xff] %v701
                %v703 = vld [vmem:[%s695 + $0x48] sm:$0xff]
                %704 = vst [vmem:[%s696 + $0x48] sm:$0xff] %v703
                %v705 = vld [vmem:[%s695 + $0x60] sm:$0xff]
                %706 = vst [vmem:[%s696 + $0x60] sm:$0xff] %v705
                %v707 = vld [vmem:[%s695 + $0x78] sm:$0xff]
                %708 = vst [vmem:[%s696 + $0x78] sm:$0xff] %v707
                %v709 = vld [vmem:[%s695 + $0x90] sm:$0xff]
                %710 = vst [vmem:[%s696 + $0x90] sm:$0xff] %v709
                %v711 = vld [vmem:[%s695 + $0xa8] sm:$0xff]
                %712 = vst [vmem:[%s696 + $0xa8] sm:$0xff] %v711
                %v713 = vld [vmem:[%s695 + $0xc0] sm:$0xff]
                %714 = vst [vmem:[%s696 + $0xc0] sm:$0xff] %v713
                %v715 = vld [vmem:[%s695 + $0xd8] sm:$0xff]
                %716 = vst [vmem:[%s696 + $0xd8] sm:$0xff] %v715
                %v717 = vld [vmem:[%s695 + $0xf0] sm:$0xff]
                %718 = vst [vmem:[%s696 + $0xf0] sm:$0xff] %v717
                %v719 = vld [vmem:[%s695 + $0x8] sm:$0xff]
                %720 = vst [vmem:[%s696 + $0x8] sm:$0xff] %v719
                %v721 = vld [vmem:[%s695 + $0x20] sm:$0xff]
                %722 = vst [vmem:[%s696 + $0x20] sm:$0xff] %v721
                %v723 = vld [vmem:[%s695 + $0x38] sm:$0xff]
                %724 = vst [vmem:[%s696 + $0x38] sm:$0xff] %v723
                %v725 = vld [vmem:[%s695 + $0x50] sm:$0xff]
                %726 = vst [vmem:[%s696 + $0x50] sm:$0xff] %v725
                %v727 = vld [vmem:[%s695 + $0x68] sm:$0xff]
                %728 = vst [vmem:[%s696 + $0x68] sm:$0xff] %v727
                %v729 = vld [vmem:[%s695 + $0x80] sm:$0xff]
                %730 = vst [vmem:[%s696 + $0x80] sm:$0xff] %v729
                %v731 = vld [vmem:[%s695 + $0x98] sm:$0xff]
                %732 = vst [vmem:[%s696 + $0x98] sm:$0xff] %v731
                %v733 = vld [vmem:[%s695 + $0xb0] sm:$0xff]
                %734 = vst [vmem:[%s696 + $0xb0] sm:$0xff] %v733
                %v735 = vld [vmem:[%s695 + $0xc8] sm:$0xff]
                %736 = vst [vmem:[%s696 + $0xc8] sm:$0xff] %v735
                %v737 = vld [vmem:[%s695 + $0xe0] sm:$0xff]
                %738 = vst [vmem:[%s696 + $0xe0] sm:$0xff] %v737
                %v739 = vld [vmem:[%s695 + $0xf8] sm:$0xff]
                %740 = vst [vmem:[%s696 + $0xf8] sm:$0xff] %v739
                %v741 = vld [vmem:[%s695 + $0x10] sm:$0xff]
                %742 = vst [vmem:[%s696 + $0x10] sm:$0xff] %v741
                %v743 = vld [vmem:[%s695 + $0x28] sm:$0xff]
                %744 = vst [vmem:[%s696 + $0x28] sm:$0xff] %v743
                %v745 = vld [vmem:[%s695 + $0x40] sm:$0xff]
                %746 = vst [vmem:[%s696 + $0x40] sm:$0xff] %v745
                %v747 = vld [vmem:[%s695 + $0x58] sm:$0xff]
                %748 = vst [vmem:[%s696 + $0x58] sm:$0xff] %v747
                %v749 = vld [vmem:[%s695 + $0x70] sm:$0xff]
                %750 = vst [vmem:[%s696 + $0x70] sm:$0xff] %v749
                %v751 = vld [vmem:[%s695 + $0x88] sm:$0xff]
                %752 = vst [vmem:[%s696 + $0x88] sm:$0xff] %v751
                %v753 = vld [vmem:[%s695 + $0xa0] sm:$0xff]
                %754 = vst [vmem:[%s696 + $0xa0] sm:$0xff] %v753
                %v755 = vld [vmem:[%s695 + $0xb8] sm:$0xff]
                %756 = vst [vmem:[%s696 + $0xb8] sm:$0xff] %v755
                %v757 = vld [vmem:[%s695 + $0xd0] sm:$0xff]
                %758 = vst [vmem:[%s696 + $0xd0] sm:$0xff] %v757
                %v759 = vld [vmem:[%s695 + $0xe8] sm:$0xff]
                %760 = vst [vmem:[%s696 + $0xe8] sm:$0xff] %v759
                %v761 = vld [vmem:[%s695 + $0x100] sm:$0xff]
                %762 = vst [vmem:[%s696 + $0x100] sm:$0xff] %v761
                %s763 = sadd.s32 1, %s694
                %p764 = scmp.ge.s32.totalorder %s763, %s686
                %s765 = scalar_select %p764, 0, %s763
                %s766 = smul.u32 %s765, 264
                %s767 = smul.u32 %s765, 264
                %s768 = scalar_lea.vmem %s667, %s766 [#allocation6]
                %s769 = scalar_lea.vmem %s680, %s767
              $region53: #{tpu_custom_call.1} parent=47 // loop_footer
                %s691 = sadd.s32 %s689, 1
              $region54: #{tpu_custom_call.1} parent=47 // loop_footer_branch
                %688 = sbr.rel target = $region50
              $region55: #{tpu_custom_call.1} parent=47 // loop_exit
                _
              %s770 = sdiv.u32.pop %s674, 11
              %s771 = srem.u32.pop %s674, 11
              %s772 = smul.u32 %s770, 11
              %s773 = smul.u32 24, %s772
              %s774 = scalar_lea.vmem %s667, %s773 [#allocation6]
              %s775 = smul.u32 24, %s772
              %s776 = scalar_lea.vmem %s680, %s775
              // While loop
              $region56: #{tpu_custom_call.1} parent=47 // loop_pre_header
                _
              $region57: #{tpu_custom_call.1} parent=47 // loop_header
                %s778 = sphi 0, %s780
                %p779 = scmp.ge.s32.totalorder %s778, %s771
                %s783 = sphi 0, %s794
                %s784 = sphi %s774, %s797
                %s785 = sphi %s776, %s798
              $region58: #{tpu_custom_call.1} parent=47 // loop_header_branch
                %782 = sbr.rel (%p779) target = $region62
              $region59: #{tpu_custom_call.1} parent=47 // loop_body
                %v786 = vld [vmem:[%s784] sm:$0xff]
                %787 = vst [vmem:[%s785] sm:$0xff] %v786
                %v788 = vld [vmem:[%s784 + $0x8] sm:$0xff]
                %789 = vst [vmem:[%s785 + $0x8] sm:$0xff] %v788
                %v790 = vld [vmem:[%s784 + $0x10] sm:$0xff]
                %791 = vst [vmem:[%s785 + $0x10] sm:$0xff] %v790
                %s792 = sadd.s32 1, %s783
                %p793 = scmp.ge.s32.totalorder %s792, %s771
                %s794 = scalar_select %p793, 0, %s792
                %s795 = smul.u32 %s794, 24
                %s796 = smul.u32 %s794, 24
                %s797 = scalar_lea.vmem %s774, %s795 [#allocation6]
                %s798 = scalar_lea.vmem %s776, %s796
              $region60: #{tpu_custom_call.1} parent=47 // loop_footer
                %s780 = sadd.s32 %s778, 1
              $region61: #{tpu_custom_call.1} parent=47 // loop_footer_branch
                %777 = sbr.rel target = $region57
              $region62: #{tpu_custom_call.1} parent=47 // loop_exit
                _
            $region48: #{tpu_custom_call.1} parent=43 // pred_fallthru
              _
            // Predicated region
            $region63: #{tpu_custom_call.1} parent=43 // pred_check
              _
            $region64: #{tpu_custom_call.1} parent=43 // pred_check_branch
              %800 = sbr.rel target = $region66
            $region65: #{tpu_custom_call.1} parent=43 // pred_region
              _
            $region66: #{tpu_custom_call.1} parent=43 // pred_fallthru
              _
          $region44: #{tpu_custom_call.1} parent=39 // pred_fallthru
            _
          %801 = vnop
        $region40: #{tpu_custom_call.1} parent=27 // pred_fallthru
          _
      $region28: #{tpu_custom_call.1} parent=5 // pred_fallthru
        _
      %p802 = scmp.le.s32.totalorder 2, %s12
      // Predicated region
      $region67: #{tpu_custom_call.1} parent=5 // pred_check
        %p803 = pneg %p802
      $region68: #{tpu_custom_call.1} parent=5 // pred_check_branch
        %805 = sbr.rel (%p803) target = $region70
      $region69: #{tpu_custom_call.1} parent=5 // pred_region
        %s806 = ssub.s32 %s12, 2
        // Predicated region
        $region71: #{tpu_custom_call.1} parent=69 // pred_check
          %p807 = pneg %p88
        $region72: #{tpu_custom_call.1} parent=69 // pred_check_branch
          %809 = sbr.rel (%p807) target = $region74
        $region73: #{tpu_custom_call.1} parent=69 // pred_region
          %s810 = sand.u32 %s73, 1
          %s811 = sand.u32 %s73, 1
          %s812 = smul.addr %s811, 768
          %s813 = scalar_lea.vmem [#allocation6], %s812
        $region74: #{tpu_custom_call.1} parent=69 // pred_fallthru
          _
      $region70: #{tpu_custom_call.1} parent=5 // pred_fallthru
        _
    $region6: #{tpu_custom_call.1} parent=1 // loop_footer
      %s16 = sadd.s32 1, %s12
    $region7: #{tpu_custom_call.1} parent=1 // loop_footer_branch
      %11 = sbr.rel target = $region3
    $region8: #{tpu_custom_call.1} parent=1 // loop_exit
      _
    %814 = vsyncpa [#allocation3], 1
    %s815 = scalar_lea.sflag [#allocation3], 1
    %816 = vsyncpa %s815, 1
    %817 = vsyncpa [#allocation5], 1

</llo_original>
